<compile_context>
chip_gen: v7x
topology: tpu7x:2x2x1
jax: 0.10.0
libtpu: 0.0.40
codegen_flags: <defaults>
</compile_context>

<pallas_src>
import functools

import jax
import jax.numpy as jnp
from jax.experimental import pallas as pl
from jax.experimental.pallas import tpu as pltpu


def _round_up(x, m):
    return (x + m - 1) // m * m


def _gcn_fused_kernel(x_ref, w0_ref, w_ref, b_ref, adj_ref, o_ref, h_scr, sup_scr, *, tm):
    """Grid = (num_layers, num_row_tiles).

    Per grid step: out_rows = adj[row strip] @ (h @ W_l) + b_l  (+ ReLU on hidden layers).
    h and support live in VMEM scratch (bf16) and persist across the whole grid.
    """
    l = pl.program_id(0)
    i = pl.program_id(1)
    last_layer = pl.num_programs(0) - 1

    # Per-layer prologue (first row strip only): support = H_l @ W_l, computed once
    # per layer and kept resident in VMEM as bf16 so the dominant adj matmul never
    # recomputes it.  Layer 0 reads the (N_pad, F_in_pad) input features; later
    # layers read the (N_pad, F_out_pad) resident activations.
    @pl.when((i == 0) & (l == 0))
    def _():
        sup_scr[...] = jnp.dot(
            x_ref[...], w0_ref[...], preferred_element_type=jnp.float32
        ).astype(jnp.bfloat16)

    @pl.when((i == 0) & (l > 0))
    def _():
        sup_scr[...] = jnp.dot(
            h_scr[...], w_ref[0], preferred_element_type=jnp.float32
        ).astype(jnp.bfloat16)

    # Dominant matmul on the MXU: bf16 x bf16 -> f32 accumulation.
    out = jnp.dot(adj_ref[...], sup_scr[...], preferred_element_type=jnp.float32)
    out = out + b_ref[0]  # (1, F_out_pad) f32 bias broadcast over rows

    row0 = pl.multiple_of(i * tm, tm)

    # Hidden layers: ReLU, then write this row strip of the next layer's
    # activations (bf16, VMEM-resident).  Skipped on the final layer.
    @pl.when(l < last_layer)
    def _():
        h_scr[pl.ds(row0, tm), :] = jnp.maximum(out, 0.0).astype(jnp.bfloat16)

    # Final layer only: lane-dense f32 logits.  Earlier layers never touch o_ref
    # (and their out index_map pins block (0,0)), so no intermediate HBM writeback.
    @pl.when(l == last_layer)
    def _():
        o_ref[...] = out.astype(o_ref.dtype)


def gcn_forward(x, adj, params):
    """GCN.forward: all GraphConvolution layers fused into one pallas_call.

    x: (N, nfeat) f32, adj: (N, N) f32, params: list of (W, b).
    Dropout between layers is identity (inference mode).
    """
    N, f_in = x.shape
    L = len(params)
    nclass = params[-1][0].shape[1]

    # Separate padded widths: input width only where needed, everything else at
    # the (typically much smaller) hidden/class width.
    F_in_pad = _round_up(f_in, 128)
    F_out_pad = _round_up(max(w.shape[1] for (w, _) in params), 128)
    N_pad = _round_up(N, 128)

    # ---- generation-aware VMEM budget & adjacency tiling ----
    try:
        vmem_cap = int(pltpu.get_tpu_info().vmem_capacity_bytes)
    except Exception:
        vmem_cap = 64 << 20  # conservative (v7x-sized) fallback
    vmem_budget = min(int(vmem_cap * 0.75), 100 << 20)

    def vmem_bytes(tm_):
        scratch = 2 * N_pad * F_out_pad * 2                 # h_scr + sup_scr (bf16)
        resident_in = 2 * (N_pad * F_in_pad * 2             # x  (double-buffered bf16)
                           + F_in_pad * F_out_pad * 2       # W0
                           + F_out_pad * F_out_pad * 2      # W_l
                           + F_out_pad * 4)                 # b_l
        out_blk = 2 * tm_ * F_out_pad * 4                   # output block (f32)
        adj_blk = 2 * tm_ * N_pad * 2                       # adj row strip (bf16)
        return scratch + resident_in + out_blk + adj_blk

    if vmem_bytes(N_pad) <= vmem_budget:
        tm = N_pad  # whole adjacency stays VMEM-resident: one HBM read for the whole pass
    else:
        tm = 128
        for cand in (512, 256):
            if N_pad % cand == 0 and vmem_bytes(cand) <= vmem_budget:
                tm = cand
                break
        # TODO(synk): in streaming mode, pipeline_mode=pl.Buffered(3) on the adj
        # strip + single-buffering the constant-index x/W0 blocks would hide the
        # per-layer support-matmul bubble and raise the residency threshold.
    R = N_pad // tm

    # ---- pad / pack operands ----
    # Zero padding keeps the math exact on [:N, :nclass]; in particular the padded
    # *columns* of adj MUST stay zero so padded rows of h (which pick up relu(bias)
    # each layer) never contribute to real rows.
    x_p = jnp.zeros((N_pad, F_in_pad), jnp.bfloat16).at[:N, :f_in].set(x.astype(jnp.bfloat16))
    adj_p = jnp.zeros((N_pad, N_pad), jnp.bfloat16).at[:N, :N].set(adj.astype(jnp.bfloat16))

    w0, _ = params[0]
    w0_p = (
        jnp.zeros((F_in_pad, F_out_pad), jnp.bfloat16)
        .at[: w0.shape[0], : w0.shape[1]]
        .set(w0.astype(jnp.bfloat16))
    )
    # Layers >= 1 share one (F_out_pad, F_out_pad) slab; slot 0 is a dummy (never
    # read -- layer 0 uses w0_p) so the index_map stays a plain (l, 0, 0).
    w_rest = jnp.zeros((L, F_out_pad, F_out_pad), jnp.bfloat16)
    for li in range(1, L):
        w, _ = params[li]
        w_rest = w_rest.at[li, : w.shape[0], : w.shape[1]].set(w.astype(jnp.bfloat16))
    b_stack = jnp.zeros((L, 1, F_out_pad), jnp.float32)
    for li, (_, b) in enumerate(params):
        b_stack = b_stack.at[li, 0, : b.shape[0]].set(b.astype(jnp.float32))

    kernel = functools.partial(_gcn_fused_kernel, tm=tm)

    # Output blocks are only materialized during the final layer: for l < L-1 the
    # out index_map pins block (0, 0) (revisited, never stored by the kernel), so
    # only R lane-dense writebacks ever reach HBM.  The layer axis MUST stay the
    # outermost, sequential grid dimension for this to be correct.
    if L > 1:
        last = L - 1
        out_index_map = lambda l, i: (jnp.where(l == last, i, 0), 0)
    else:
        out_index_map = lambda l, i: (i, 0)

    flops = 2 * N_pad * F_out_pad * (F_in_pad + (L - 1) * F_out_pad + L * N_pad)
    adj_reads = 1 if R == 1 else L
    bytes_accessed = int(
        adj_p.size * 2 * adj_reads
        + x_p.size * 2
        + w0_p.size * 2
        + w_rest.size * 2
        + b_stack.size * 4
        + N_pad * F_out_pad * 4
    )

    out_p = pl.pallas_call(
        kernel,
        out_shape=jax.ShapeDtypeStruct((N_pad, F_out_pad), jnp.float32),
        grid_spec=pltpu.PrefetchScalarGridSpec(
            num_scalar_prefetch=0,
            grid=(L, R),
            in_specs=[
                pl.BlockSpec((N_pad, F_in_pad), lambda l, i: (0, 0)),             # x (1 DMA)
                pl.BlockSpec((F_in_pad, F_out_pad), lambda l, i: (0, 0)),         # W0 (1 DMA)
                pl.BlockSpec((1, F_out_pad, F_out_pad), lambda l, i: (l, 0, 0)),  # W_l (l>=1)
                pl.BlockSpec((1, 1, F_out_pad), lambda l, i: (l, 0, 0)),          # b_l
                pl.BlockSpec((tm, N_pad), lambda l, i: (i, 0)),                   # adj row strip
            ],
            out_specs=pl.BlockSpec((tm, F_out_pad), out_index_map),
            scratch_shapes=[
                pltpu.VMEM((N_pad, F_out_pad), jnp.bfloat16),  # h  (layer activations)
                pltpu.VMEM((N_pad, F_out_pad), jnp.bfloat16),  # support = h @ W_l
            ],
        ),
        compiler_params=pltpu.CompilerParams(
            # Row-tile axis reuses the resident h/support scratch (cross-iteration
            # dependency) and the layer axis is sequential -> both "arbitrary".
            dimension_semantics=("arbitrary", "arbitrary"),
            vmem_limit_bytes=vmem_budget,
        ),
        cost_estimate=pl.CostEstimate(
            flops=flops, transcendentals=0, bytes_accessed=bytes_accessed
        ),
    )(x_p, w0_p, w_rest, b_stack, adj_p)

    return out_p[:N, :nclass]


def init_gcn_params(key, nfeat, nhid, nclass, n_layers):
    """Deterministic parameter init (uniform, PyTorch-like stdv = 1/sqrt(out))."""
    dims = [(nfeat, nhid)] + [(nhid, nhid)] * (n_layers - 1) + [(nhid, nclass)]
    params = []
    for (fin, fout) in dims:
        key, kw, kb = jax.random.split(key, 3)
        stdv = 1.0 / jnp.sqrt(jnp.float32(fout))
        w = jax.random.uniform(kw, (fin, fout), jnp.float32, -stdv, stdv)
        b = jax.random.uniform(kb, (fout,), jnp.float32, -stdv, stdv)
        params.append((w, b))
    return params


def gcn_reference_f32(x, adj, params):
    """Pure f32 reference (original module semantics)."""
    h = x
    for i, (w, b) in enumerate(params):
        h = adj @ (h @ w) + b
        if i != len(params) - 1:
            h = jnp.maximum(h, 0.0)
    return h


def gcn_reference_bf16(x, adj, params):
    """Reference matching the kernel's arithmetic (bf16 matmul inputs, f32 accum)."""
    h = x
    adj_b = adj.astype(jnp.bfloat16)
    for i, (w, b) in enumerate(params):
        sup = jnp.dot(
            h.astype(jnp.bfloat16), w.astype(jnp.bfloat16),
            preferred_element_type=jnp.float32,
        ).astype(jnp.bfloat16)
        h = jnp.dot(adj_b, sup, preferred_element_type=jnp.float32) + b
        if i != len(params) - 1:
            h = jnp.maximum(h, 0.0)
    return h


if __name__ == "__main__":
    # Small synthetic graph.
    N = 64        # number of nodes
    nfeat = 32    # input feature dim
    nhid = 32     # hidden dim
    nclass = 8    # output classes
    n_layers = 2  # -> total GraphConvolution layers = n_layers + 1 = 3

    key = jax.random.PRNGKey(0)
    key, kx, ka = jax.random.split(key, 3)

    x = jax.random.normal(kx, (N, nfeat), jnp.float32)

    # Symmetric normalized adjacency with self-loops (typical GCN input).
    a = (jax.random.uniform(ka, (N, N)) < 0.1).astype(jnp.float32)
    a = jnp.maximum(a, a.T) + jnp.eye(N, dtype=jnp.float32)
    deg = jnp.sum(a, axis=1)
    d_inv_sqrt = 1.0 / jnp.sqrt(deg)
    adj = a * d_inv_sqrt[:, None] * d_inv_sqrt[None, :]

    params = init_gcn_params(key, nfeat, nhid, nclass, n_layers)

    out = jax.block_until_ready(gcn_forward(x, adj, params))
    ref_b = gcn_reference_bf16(x, adj, params)
    ref_f = gcn_reference_f32(x, adj, params)

    assert out.shape == (N, nclass), out.shape
    assert jnp.allclose(out, ref_b, atol=2e-3, rtol=2e-3), float(jnp.max(jnp.abs(out - ref_b)))
    assert jnp.allclose(out, ref_f, atol=5e-2, rtol=5e-2), float(jnp.max(jnp.abs(out - ref_f)))

    print("KERNEL_OK")
</pallas_src>

<mosaic_0001>
module attributes {stable_mosaic.version = 11 : i64} {
  func.func @_gcn_fused_kernel(%arg0: i32, %arg1: i32, %arg2: memref<128x128xbf16, #tpu.memory_space<vmem>>, %arg3: memref<128x128xbf16, #tpu.memory_space<vmem>>, %arg4: memref<1x128x128xbf16, #tpu.memory_space<vmem>>, %arg5: memref<1x1x128xf32, #tpu.memory_space<vmem>>, %arg6: memref<128x128xbf16, #tpu.memory_space<vmem>>, %arg7: memref<128x128xf32, #tpu.memory_space<vmem>>, %arg8: memref<128x128xbf16, #tpu.memory_space<vmem>>, %arg9: memref<128x128xbf16, #tpu.memory_space<vmem>>) attributes {dimension_semantics = [#tpu.dimension_semantics<arbitrary>, #tpu.dimension_semantics<arbitrary>], iteration_bounds = array<i64: 3, 1>, scalar_prefetch = 0 : i64, scratch_operands = 2 : i64, tpu.core_type = #tpu.core_type<tc>, window_params = [{pipeline_mode = #tpu.pipeline_mode<synchronous>, transform_indices = @transform_0, window_bounds = array<i64: 128, 128>}, {pipeline_mode = #tpu.pipeline_mode<synchronous>, transform_indices = @transform_1, window_bounds = array<i64: 128, 128>}, {transform_indices = @transform_2, window_bounds = array<i64: 1, 128, 128>}, {transform_indices = @transform_3, window_bounds = array<i64: 1, 1, 128>}, {transform_indices = @transform_4, window_bounds = array<i64: 128, 128>}, {transform_indices = @transform_5, window_bounds = array<i64: 128, 128>}]} {
    %c0_i32 = arith.constant 0 : i32
    %0 = arith.cmpi eq, %arg1, %c0_i32 : i32
    %c0_i32_0 = arith.constant 0 : i32
    %1 = arith.cmpi eq, %arg0, %c0_i32_0 : i32
    %2 = arith.andi %0, %1 : i1
    %3 = arith.extui %2 : i1 to i32
    %c0_i32_1 = arith.constant 0 : i32
    %4 = arith.cmpi ne, %3, %c0_i32_1 : i32
    scf.if %4 {
      %c0_14 = arith.constant 0 : index
      %c0_15 = arith.constant 0 : index
      %25 = vector.load %arg2[%c0_14, %c0_15] : memref<128x128xbf16, #tpu.memory_space<vmem>>, vector<128x128xbf16>
      %c0_16 = arith.constant 0 : index
      %c0_17 = arith.constant 0 : index
      %26 = vector.load %arg3[%c0_16, %c0_17] : memref<128x128xbf16, #tpu.memory_space<vmem>>, vector<128x128xbf16>
      %cst_18 = arith.constant dense<0.000000e+00> : vector<128x128xf32>
      %27 = tpu.matmul %25, %26, %cst_18 {dimension_numbers = #tpu.dot_dimension_numbers<[1], [0], [0], [1], [0, 0, 1, 1], [], []>} : vector<128x128xbf16>, vector<128x128xbf16>, vector<128x128xf32> -> vector<128x128xf32>
      %28 = arith.truncf %27 : vector<128x128xf32> to vector<128x128xbf16>
      %c0_19 = arith.constant 0 : index
      %c0_20 = arith.constant 0 : index
      %29 = vector.load %arg9[%c0_19, %c0_20] : memref<128x128xbf16, #tpu.memory_space<vmem>>, vector<128x128xbf16>
      tpu.vector_store %arg9[%c0_19, %c0_20], %28 {strides = array<i32>} : memref<128x128xbf16, #tpu.memory_space<vmem>>, vector<128x128xbf16>,
    } else {
    }
    %c0_i32_2 = arith.constant 0 : i32
    %5 = arith.cmpi eq, %arg1, %c0_i32_2 : i32
    %c0_i32_3 = arith.constant 0 : i32
    %6 = arith.cmpi sgt, %arg0, %c0_i32_3 : i32
    %7 = arith.andi %5, %6 : i1
    %8 = arith.extui %7 : i1 to i32
    %c0_i32_4 = arith.constant 0 : i32
    %9 = arith.cmpi ne, %8, %c0_i32_4 : i32
    scf.if %9 {
      %c0_14 = arith.constant 0 : index
      %c0_15 = arith.constant 0 : index
      %25 = vector.load %arg8[%c0_14, %c0_15] : memref<128x128xbf16, #tpu.memory_space<vmem>>, vector<128x128xbf16>
      %c0_16 = arith.constant 0 : index
      %c0_17 = arith.constant 0 : index
      %c0_18 = arith.constant 0 : index
      %26 = vector.load %arg4[%c0_16, %c0_17, %c0_18] : memref<1x128x128xbf16, #tpu.memory_space<vmem>>, vector<1x128x128xbf16>
      %27 = vector.shape_cast %26 : vector<1x128x128xbf16> to vector<128x128xbf16>
      %cst_19 = arith.constant dense<0.000000e+00> : vector<128x128xf32>
      %28 = tpu.matmul %25, %27, %cst_19 {dimension_numbers = #tpu.dot_dimension_numbers<[1], [0], [0], [1], [0, 0, 1, 1], [], []>} : vector<128x128xbf16>, vector<128x128xbf16>, vector<128x128xf32> -> vector<128x128xf32>
      %29 = arith.truncf %28 : vector<128x128xf32> to vector<128x128xbf16>
      %c0_20 = arith.constant 0 : index
      %c0_21 = arith.constant 0 : index
      %30 = vector.load %arg9[%c0_20, %c0_21] : memref<128x128xbf16, #tpu.memory_space<vmem>>, vector<128x128xbf16>
      tpu.vector_store %arg9[%c0_20, %c0_21], %29 {strides = array<i32>} : memref<128x128xbf16, #tpu.memory_space<vmem>>, vector<128x128xbf16>,
    } else {
    }
    %c0 = arith.constant 0 : index
    %c0_5 = arith.constant 0 : index
    %10 = vector.load %arg6[%c0, %c0_5] : memref<128x128xbf16, #tpu.memory_space<vmem>>, vector<128x128xbf16>
    %c0_6 = arith.constant 0 : index
    %c0_7 = arith.constant 0 : index
    %11 = vector.load %arg9[%c0_6, %c0_7] : memref<128x128xbf16, #tpu.memory_space<vmem>>, vector<128x128xbf16>
    %cst = arith.constant dense<0.000000e+00> : vector<128x128xf32>
    %12 = tpu.matmul %10, %11, %cst {dimension_numbers = #tpu.dot_dimension_numbers<[1], [0], [0], [1], [0, 0, 1, 1], [], []>} : vector<128x128xbf16>, vector<128x128xbf16>, vector<128x128xf32> -> vector<128x128xf32>
    %c0_8 = arith.constant 0 : index
    %c0_9 = arith.constant 0 : index
    %c0_10 = arith.constant 0 : index
    %13 = vector.load %arg5[%c0_8, %c0_9, %c0_10] : memref<1x1x128xf32, #tpu.memory_space<vmem>>, vector<1x1x128xf32>
    %14 = vector.shape_cast %13 : vector<1x1x128xf32> to vector<1x128xf32>
    %15 = vector.broadcast %14 : vector<1x128xf32> to vector<128x128xf32>
    %16 = arith.addf %12, %15 : vector<128x128xf32>
    %c128_i32 = arith.constant 128 : i32
    %17 = arith.muli %arg1, %c128_i32 : i32
    %18 = tpu.assume_multiple %17, 128 : i32
    %c2_i32 = arith.constant 2 : i32
    %19 = arith.cmpi slt, %arg0, %c2_i32 : i32
    %20 = arith.extui %19 : i1 to i32
    %c0_i32_11 = arith.constant 0 : i32
    %21 = arith.cmpi ne, %20, %c0_i32_11 : i32
    scf.if %21 {
      %cst_14 = arith.constant 0.000000e+00 : f32
      %25 = vector.broadcast %cst_14 : f32 to vector<128x128xf32>
      %26 = arith.maximumf %16, %25 : vector<128x128xf32>
      %27 = arith.truncf %26 : vector<128x128xf32> to vector<128x128xbf16>
      %28 = arith.index_cast %18 : i32 to index
      %c0_15 = arith.constant 0 : index
      %29 = vector.load %arg8[%28, %c0_15] : memref<128x128xbf16, #tpu.memory_space<vmem>>, vector<128x128xbf16>
      tpu.vector_store %arg8[%28, %c0_15], %27 {strides = array<i32>} : memref<128x128xbf16, #tpu.memory_space<vmem>>, vector<128x128xbf16>,
    } else {
    }
    %c2_i32_12 = arith.constant 2 : i32
    %22 = arith.cmpi eq, %arg0, %c2_i32_12 : i32
    %23 = arith.extui %22 : i1 to i32
    %c0_i32_13 = arith.constant 0 : i32
    %24 = arith.cmpi ne, %23, %c0_i32_13 : i32
    scf.if %24 {
      %c0_14 = arith.constant 0 : index
      %c0_15 = arith.constant 0 : index
      %25 = vector.load %arg7[%c0_14, %c0_15] : memref<128x128xf32, #tpu.memory_space<vmem>>, vector<128x128xf32>
      tpu.vector_store %arg7[%c0_14, %c0_15], %16 {strides = array<i32>} : memref<128x128xf32, #tpu.memory_space<vmem>>, vector<128x128xf32>,
    } else {
    }
    return
  }
  func.func @transform_0(%arg0: i32, %arg1: i32) -> (i32, i32) {
    %c0_i32 = arith.constant 0 : i32
    %c0_i32_0 = arith.constant 0 : i32
    %c0_i32_1 = arith.constant 0 : i32
    return %c0_i32, %c0_i32_0 : i32, i32
  }
  func.func @transform_1(%arg0: i32, %arg1: i32) -> (i32, i32) {
    %c0_i32 = arith.constant 0 : i32
    %c0_i32_0 = arith.constant 0 : i32
    %c0_i32_1 = arith.constant 0 : i32
    return %c0_i32, %c0_i32_0 : i32, i32
  }
  func.func @transform_2(%arg0: i32, %arg1: i32) -> (i32, i32, i32) {
    %c0_i32 = arith.constant 0 : i32
    %c0_i32_0 = arith.constant 0 : i32
    %c0_i32_1 = arith.constant 0 : i32
    return %arg0, %c0_i32, %c0_i32_0 : i32, i32, i32
  }
  func.func @transform_3(%arg0: i32, %arg1: i32) -> (i32, i32, i32) {
    %c0_i32 = arith.constant 0 : i32
    %c0_i32_0 = arith.constant 0 : i32
    %c0_i32_1 = arith.constant 0 : i32
    return %arg0, %c0_i32, %c0_i32_0 : i32, i32, i32
  }
  func.func @transform_4(%arg0: i32, %arg1: i32) -> (i32, i32) {
    %c0_i32 = arith.constant 0 : i32
    %c0_i32_0 = arith.constant 0 : i32
    return %arg1, %c0_i32 : i32, i32
  }
  func.func @transform_5(%arg0: i32, %arg1: i32) -> (i32, i32) {
    %c2_i32 = arith.constant 2 : i32
    %0 = arith.cmpi eq, %arg0, %c2_i32 : i32
    %c0_i32 = arith.constant 0 : i32
    %1 = arith.select %0, %arg1, %c0_i32 : i32
    %c0_i32_0 = arith.constant 0 : i32
    %c0_i32_1 = arith.constant 0 : i32
    return %1, %c0_i32_0 : i32, i32
  }
}

</mosaic_0001>

<llo_original>
// kernel: tpu_custom_call.1
$region0: #{tpu_custom_call.1}
  #allocation0 [shape = 'u32[]', space=smem, size = 0x4, offset = 0x4, fixed_abs, tag = 'smem constant byte address 0x4 - core index']
  #allocation1 [shape = 'u32[144,128]{1,0:T(1,128)}', space=vmem, size = 0x12000, scoped, tag = 'internal scratch']
  #allocation2 [shape = 'bf16[128,128]{1,0:T(16,128)(2,1)}', space=vmem, size = 0x8000, scoped, tag = 'scratch operand']
  #allocation3 [shape = 'bf16[128,128]{1,0:T(16,128)(2,1)}', space=vmem, size = 0x8000, scoped, tag = 'scratch operand']
  %s0 = inlined_call_operand.hbm [shape: bf16[128,128], index: 0, kind: input, shape index: {}]
  %s1 = inlined_call_operand.hbm [shape: bf16[128,128], index: 1, kind: input, shape index: {}]
  %s2 = inlined_call_operand.hbm [shape: bf16[3,128,128], index: 2, kind: input, shape index: {}]
  %s3 = inlined_call_operand.vmem [shape: f32[3,1,128], index: 3, kind: input, shape index: {}]
  %s4 = inlined_call_operand.hbm [shape: bf16[128,128], index: 4, kind: input, shape index: {}]
  %s5 = inlined_call_operand.hbm [shape: f32[128,128], index: 5, kind: output, shape index: {}]
  %s6 = sld [smem:[#allocation0]]
  $region85: #{tpu_custom_call.1} parent=0
    _
  %s8 = ssub.s32 1, %s6
  %s9 = scalar_select 0, %s8, %s6
  $region1: #{tpu_custom_call.1} parent=0
    #allocation4 [shape = 'u8[32768]{0}', space=vmem, size = 0x8000, scoped, tag = 'input window, operand 0, single buffered']
    #allocation5 [shape = 's32[2]{0}', space=sflag, size = 0x8, scoped, tag = 'scoped memory for tpu_custom_call.1']
    #allocation6 [shape = 's32[2]{0}', space=sflag, size = 0x8, scoped, tag = 'scoped memory for tpu_custom_call.1']
    #allocation7 [shape = 'u8[32768]{0}', space=vmem, size = 0x8000, scoped, tag = 'input window, operand 1, single buffered']
    #allocation8 [shape = 's32[1]{0}', space=sflag, size = 0x4, scoped, tag = 'scoped memory for tpu_custom_call.1']
    #allocation9 [shape = 'u8[65536]{0}', space=vmem, size = 0x10000, scoped, tag = 'input window, operand 2']
    #allocation10 [shape = 'u8[32768]{0}', space=vmem, size = 0x8000, scoped, tag = 'input window, operand 4, single buffered']
    #allocation11 [shape = 'u8[131072]{0}', space=vmem, size = 0x20000, scoped, tag = 'output window, operand 0']
    %10 = vsyncpa [#allocation5], 0
    %11 = vsyncpa [#allocation8], 0
    %12 = vsyncpa [#allocation6], 0
    %s13 = scalar_lea.sflag [#allocation6], 1
    %14 = vsyncpa %s13, 0
    loop: start=0, step=1, limit=5
    $region2: #{tpu_custom_call.1} parent=1 // loop_pre_header
      _
    $region3: #{tpu_custom_call.1} parent=1 // loop_header
      %s16 = sphi 0, %s20
      %p17 = scmp.ge.s32.totalorder %s16, 5
      %s23 = sphi 0, %s35
      %s24 = sphi 0, %s31
      %s25 = sphi 0, %s23
      %s26 = sphi 0, %s24
      %s27 = sphi 0, %s25
      %s28 = sphi 0, %s26
      %s36 = sphi 0, %s36
      %s38 = sphi 0, %s36
      %s39 = sphi 0, %s38
      %s53 = sphi 0, %s39
      %s57 = sphi 0, %s57
      %s59 = sphi 0, %s57
      %s60 = sphi 0, %s59
      %s74 = sphi 0, %s60
      %s80 = sphi 0, %s82
      %s83 = sphi 0, %s80
      %s84 = sphi 0, %s83
      %s100 = sphi 0, %s84
      %s106 = sphi 0, %s108
      %s109 = sphi 0, %s106
      %s110 = sphi 0, %s109
      %s126 = sphi 0, %s110
      %s132 = sphi 0, %s134
      %s135 = sphi 0, %s132
      %s136 = sphi 0, %s135
      %s152 = sphi 0, %s136
      %s162 = sphi 0, %s164
      %s165 = sphi 0, %s162
      %s166 = sphi 0, %s165
      %s182 = sphi 0, %s166
    $region4: #{tpu_custom_call.1} parent=1 // loop_header_branch
      %19 = sbr.rel (%p17) target = $region8
    $region5: #{tpu_custom_call.1} parent=1 // loop_body
      %s21 = ssub.s32 %s16, 1
      %s22 = ssub.s32 %s16, 2
      %s29 = sadd.s32 1, %s24
      %p30 = scmp.ge.s32.totalorder %s29, 1
      %s31 = scalar_select %p30, 0, %s29
      %s32 = sadd.s32 1, %s23
      %s33 = scalar_select %p30, %s32, %s23
      %p34 = scmp.ge.s32.totalorder %s33, 3
      %s35 = scalar_select %p34, 0, %s33
      %s37 = sadd.s32 %s36, 1
      %p40 = scmp.eq.s32.totalorder %s16, 2
      %p41 = scmp.ne.s32.totalorder %s36, %s38
      %p42 = scmp.eq.s32.totalorder %s16, 0
      %p43 = por %p41, %p42
      %p44 = scmp.ne.s32.totalorder %s36, %s38
      %p45 = scmp.eq.s32.totalorder %s21, 2
      %p46 = por %p44, %p45
      %p47 = scmp.ne.s32.totalorder %s38, %s39
      %p48 = scmp.eq.s32.totalorder %s21, 0
      %p49 = por %p47, %p48
      %p50 = scmp.ne.s32.totalorder %s38, %s39
      %p51 = scmp.eq.s32.totalorder %s22, 2
      %p52 = por %p50, %p51
      %p54 = scmp.ne.s32.totalorder %s39, %s53
      %p55 = scmp.eq.s32.totalorder %s22, 0
      %p56 = por %p54, %p55
      %s58 = sadd.s32 %s57, 1
      %p61 = scmp.eq.s32.totalorder %s16, 2
      %p62 = scmp.ne.s32.totalorder %s57, %s59
      %p63 = scmp.eq.s32.totalorder %s16, 0
      %p64 = por %p62, %p63
      %p65 = scmp.ne.s32.totalorder %s57, %s59
      %p66 = scmp.eq.s32.totalorder %s21, 2
      %p67 = por %p65, %p66
      %p68 = scmp.ne.s32.totalorder %s59, %s60
      %p69 = scmp.eq.s32.totalorder %s21, 0
      %p70 = por %p68, %p69
      %p71 = scmp.ne.s32.totalorder %s59, %s60
      %p72 = scmp.eq.s32.totalorder %s22, 2
      %p73 = por %p71, %p72
      %p75 = scmp.ne.s32.totalorder %s60, %s74
      %p76 = scmp.eq.s32.totalorder %s22, 0
      %p77 = por %p75, %p76
      %s78 = ssub.s32 %s23, %s35
      %p79 = scmp.eq.s32.totalorder %s78, 0
      %s81 = sadd.s32 %s80, 1
      %s82 = scalar_select %p79, %s80, %s81
      %p85 = pneg %p79
      %p86 = scmp.eq.s32.totalorder %s16, 2
      %p87 = por %p85, %p86
      %p88 = scmp.ne.s32.totalorder %s80, %s83
      %p89 = scmp.eq.s32.totalorder %s16, 0
      %p90 = por %p88, %p89
      %p91 = scmp.ne.s32.totalorder %s80, %s83
      %p92 = scmp.eq.s32.totalorder %s21, 2
      %p93 = por %p91, %p92
      %p94 = scmp.ne.s32.totalorder %s83, %s84
      %p95 = scmp.eq.s32.totalorder %s21, 0
      %p96 = por %p94, %p95
      %p97 = scmp.ne.s32.totalorder %s83, %s84
      %p98 = scmp.eq.s32.totalorder %s22, 2
      %p99 = por %p97, %p98
      %p101 = scmp.ne.s32.totalorder %s84, %s100
      %p102 = scmp.eq.s32.totalorder %s22, 0
      %p103 = por %p101, %p102
      %s104 = ssub.s32 %s23, %s35
      %p105 = scmp.eq.s32.totalorder %s104, 0
      %s107 = sadd.s32 %s106, 1
      %s108 = scalar_select %p105, %s106, %s107
      %p111 = pneg %p105
      %p112 = scmp.eq.s32.totalorder %s16, 2
      %p113 = por %p111, %p112
      %p114 = scmp.ne.s32.totalorder %s106, %s109
      %p115 = scmp.eq.s32.totalorder %s16, 0
      %p116 = por %p114, %p115
      %p117 = scmp.ne.s32.totalorder %s106, %s109
      %p118 = scmp.eq.s32.totalorder %s21, 2
      %p119 = por %p117, %p118
      %p120 = scmp.ne.s32.totalorder %s109, %s110
      %p121 = scmp.eq.s32.totalorder %s21, 0
      %p122 = por %p120, %p121
      %p123 = scmp.ne.s32.totalorder %s109, %s110
      %p124 = scmp.eq.s32.totalorder %s22, 2
      %p125 = por %p123, %p124
      %p127 = scmp.ne.s32.totalorder %s110, %s126
      %p128 = scmp.eq.s32.totalorder %s22, 0
      %p129 = por %p127, %p128
      %s130 = ssub.s32 %s24, %s31
      %p131 = scmp.eq.s32.totalorder %s130, 0
      %s133 = sadd.s32 %s132, 1
      %s134 = scalar_select %p131, %s132, %s133
      %p137 = pneg %p131
      %p138 = scmp.eq.s32.totalorder %s16, 2
      %p139 = por %p137, %p138
      %p140 = scmp.ne.s32.totalorder %s132, %s135
      %p141 = scmp.eq.s32.totalorder %s16, 0
      %p142 = por %p140, %p141
      %p143 = scmp.ne.s32.totalorder %s132, %s135
      %p144 = scmp.eq.s32.totalorder %s21, 2
      %p145 = por %p143, %p144
      %p146 = scmp.ne.s32.totalorder %s135, %s136
      %p147 = scmp.eq.s32.totalorder %s21, 0
      %p148 = por %p146, %p147
      %p149 = scmp.ne.s32.totalorder %s135, %s136
      %p150 = scmp.eq.s32.totalorder %s22, 2
      %p151 = por %p149, %p150
      %p153 = scmp.ne.s32.totalorder %s136, %s152
      %p154 = scmp.eq.s32.totalorder %s22, 0
      %p155 = por %p153, %p154
      %p156 = scmp.eq.s32.totalorder %s23, 2
      %s157 = scalar_select %p156, %s24, 0
      %p158 = scmp.eq.s32.totalorder %s35, 2
      %s159 = scalar_select %p158, %s31, 0
      %s160 = ssub.s32 %s157, %s159
      %p161 = scmp.eq.s32.totalorder %s160, 0
      %s163 = sadd.s32 %s162, 1
      %s164 = scalar_select %p161, %s162, %s163
      %p167 = pneg %p161
      %p168 = scmp.eq.s32.totalorder %s16, 2
      %p169 = por %p167, %p168
      %p170 = scmp.ne.s32.totalorder %s162, %s165
      %p171 = scmp.eq.s32.totalorder %s16, 0
      %p172 = por %p170, %p171
      %p173 = scmp.ne.s32.totalorder %s162, %s165
      %p174 = scmp.eq.s32.totalorder %s21, 2
      %p175 = por %p173, %p174
      %p176 = scmp.ne.s32.totalorder %s165, %s166
      %p177 = scmp.eq.s32.totalorder %s21, 0
      %p178 = por %p176, %p177
      %p179 = scmp.ne.s32.totalorder %s165, %s166
      %p180 = scmp.eq.s32.totalorder %s22, 2
      %p181 = por %p179, %p180
      %p183 = scmp.ne.s32.totalorder %s166, %s182
      %p184 = scmp.eq.s32.totalorder %s22, 0
      %p185 = por %p183, %p184
      %p186 = scmp.le.s32.totalorder 1, %s16
      %p187 = scmp.lt.s32.totalorder %s16, 4
      %p188 = pnand %p186, %p187
      %p189 = pneg %p188
      // Predicated region
      $region9: #{tpu_custom_call.1} parent=5 // pred_check
        _
      $region10: #{tpu_custom_call.1} parent=5 // pred_check_branch
        %191 = sbr.rel (%p188) target = $region12
      $region11: #{tpu_custom_call.1} parent=5 // pred_region
        %s192 = ssub.s32 %s16, 1
        // Predicated region
        $region13: #{tpu_custom_call.1} parent=11 // pred_check
          %p193 = pneg %p49
        $region14: #{tpu_custom_call.1} parent=11 // pred_check_branch
          %195 = sbr.rel (%p193) target = $region16
        $region15: #{tpu_custom_call.1} parent=11 // pred_region
          %s197 = ssub.s32 1024, 1024
          %198 = vsyncadd [#allocation5], %s197
          %s199 = sshll.u32 [#allocation4], 4
          %s200 = int_to_ptr.vmem [resolvable:$true] %s199
          %205 = dma.hbm_to_vmem [thread:$0]  %s0, 1024, %s200, [#allocation5], 64, 64, 4
        $region16: #{tpu_custom_call.1} parent=11 // pred_fallthru
          _
        // Predicated region
        $region17: #{tpu_custom_call.1} parent=11 // pred_check
          %p206 = pneg %p70
        $region18: #{tpu_custom_call.1} parent=11 // pred_check_branch
          %208 = sbr.rel (%p206) target = $region20
        $region19: #{tpu_custom_call.1} parent=11 // pred_region
          %s210 = ssub.s32 1024, 1024
          %211 = vsyncadd [#allocation8], %s210
          %s212 = sshll.u32 [#allocation7], 4
          %s213 = int_to_ptr.vmem [resolvable:$true] %s212
          %218 = dma.hbm_to_vmem [thread:$0]  %s1, 1024, %s213, [#allocation8], 64, 64, 4
        $region20: #{tpu_custom_call.1} parent=11 // pred_fallthru
          _
        // Predicated region
        $region21: #{tpu_custom_call.1} parent=11 // pred_check
          %p219 = pneg %p148
        $region22: #{tpu_custom_call.1} parent=11 // pred_check_branch
          %221 = sbr.rel (%p219) target = $region24
        $region23: #{tpu_custom_call.1} parent=11 // pred_region
          %s222 = smul.u32 16, %s26
          %s224 = ssub.s32 1024, 1024
          %225 = vsyncadd [#allocation8], %s224
          %s226 = smul.addr %s222, 64
          %s227 = scalar_lea.hbm %s4, %s226
          %s228 = sshll.u32 [#allocation10], 4
          %s229 = int_to_ptr.vmem [resolvable:$true] %s228
          %234 = dma.hbm_to_vmem [thread:$0]  %s227, 1024, %s229, [#allocation8], 64, 64, 4
        $region24: #{tpu_custom_call.1} parent=11 // pred_fallthru
          _
      $region12: #{tpu_custom_call.1} parent=5 // pred_fallthru
        _
      %p235 = scmp.lt.s32.totalorder %s16, 3
      // Predicated region
      $region25: #{tpu_custom_call.1} parent=5 // pred_check
        %p236 = pneg %p235
      $region26: #{tpu_custom_call.1} parent=5 // pred_check_branch
        %238 = sbr.rel (%p236) target = $region28
      $region27: #{tpu_custom_call.1} parent=5 // pred_region
        // Predicated region
        $region29: #{tpu_custom_call.1} parent=27 // pred_check
          %p239 = pneg %p90
        $region30: #{tpu_custom_call.1} parent=27 // pred_check_branch
          %241 = sbr.rel (%p239) target = $region32
        $region31: #{tpu_custom_call.1} parent=27 // pred_region
          %s242 = sand.u32 %s16, 1
          %s243 = scalar_lea.sflag [#allocation5], %s242
          %s244 = sand.u32 %s80, 1
          %s245 = smul.addr %s244, 64
          %s246 = scalar_lea.vmem [#allocation9], %s245
          %s248 = ssub.s32 1024, 1024
          %249 = vsyncadd %s243, %s248
          %s250 = smul.addr %s23, 16
          %s251 = smul.addr %s250, 64
          %s252 = scalar_lea.hbm %s2, %s251
          %s253 = sshll.u32 %s246, 4
          %s254 = int_to_ptr.vmem [resolvable:$true] %s253
          %259 = dma.hbm_to_vmem [thread:$0]  %s252, 1024, %s254, %s243, 64, 64, 4
        $region32: #{tpu_custom_call.1} parent=27 // pred_fallthru
          _
        // Predicated region
        $region33: #{tpu_custom_call.1} parent=27 // pred_check
          %p260 = pneg %p116
        $region34: #{tpu_custom_call.1} parent=27 // pred_check_branch
          %262 = sbr.rel (%p260) target = $region36
        $region35: #{tpu_custom_call.1} parent=27 // pred_region
          %p263 = scmp.lt.s32.totalorder %s23, 2
          %s264 = scalar_select %p263, %s23, 2
          %s265 = scalar_lea.vmem %s3, %s264
        $region36: #{tpu_custom_call.1} parent=27 // pred_fallthru
          _
      $region28: #{tpu_custom_call.1} parent=5 // pred_fallthru
        _
      %p266 = scmp.le.s32.totalorder 1, %s16
      %p267 = scmp.lt.s32.totalorder %s16, 4
      %p268 = pnand %p266, %p267
      %p269 = pneg %p268
      // Predicated region
      $region37: #{tpu_custom_call.1} parent=5 // pred_check
        _
      $region38: #{tpu_custom_call.1} parent=5 // pred_check_branch
        %271 = sbr.rel (%p268) target = $region40
      $region39: #{tpu_custom_call.1} parent=5 // pred_region
        %s272 = ssub.s32 %s16, 1
        // Predicated region
        $region41: #{tpu_custom_call.1} parent=39 // pred_check
          %p273 = pneg %p49
        $region42: #{tpu_custom_call.1} parent=39 // pred_check_branch
          %275 = sbr.rel (%p273) target = $region44
        $region43: #{tpu_custom_call.1} parent=39 // pred_region
          %276 = dma.done [#allocation5], 1024
        $region44: #{tpu_custom_call.1} parent=39 // pred_fallthru
          _
        // Predicated region
        $region45: #{tpu_custom_call.1} parent=39 // pred_check
          %p277 = pneg %p70
        $region46: #{tpu_custom_call.1} parent=39 // pred_check_branch
          %279 = sbr.rel (%p277) target = $region48
        $region47: #{tpu_custom_call.1} parent=39 // pred_region
          %280 = dma.done [#allocation8], 1024
        $region48: #{tpu_custom_call.1} parent=39 // pred_fallthru
          _
        %s281 = sand.u32 %s21, 1
        %s282 = scalar_lea.sflag [#allocation5], %s281
        %s283 = sand.u32 %s83, 1
        %s284 = smul.addr %s283, 64
        %s285 = scalar_lea.vmem [#allocation9], %s284
        // Predicated region
        $region49: #{tpu_custom_call.1} parent=39 // pred_check
          %p286 = pneg %p96
        $region50: #{tpu_custom_call.1} parent=39 // pred_check_branch
          %288 = sbr.rel (%p286) target = $region52
        $region51: #{tpu_custom_call.1} parent=39 // pred_region
          %289 = dma.done %s282, 1024
        $region52: #{tpu_custom_call.1} parent=39 // pred_fallthru
          _
        // Predicated region
        $region53: #{tpu_custom_call.1} parent=39 // pred_check
          %p290 = pneg %p148
        $region54: #{tpu_custom_call.1} parent=39 // pred_check_branch
          %292 = sbr.rel (%p290) target = $region56
        $region55: #{tpu_custom_call.1} parent=39 // pred_region
          %293 = dma.done [#allocation8], 1024
        $region56: #{tpu_custom_call.1} parent=39 // pred_fallthru
          _
        %p294 = pneg %p49
        %p295 = pneg %p46
        %p296 = pneg %p70
        %p297 = pneg %p67
        %s298 = sand.u32 %s21, 1
        %s299 = scalar_lea.sflag [#allocation5], %s298
        %s300 = sand.u32 %s83, 1
        %s301 = smul.addr %s300, 64
        %s302 = scalar_lea.vmem [#allocation9], %s301
        %p303 = pneg %p96
        %p304 = pneg %p93
        %p305 = scmp.lt.s32.totalorder %s25, 2
        %s306 = scalar_select %p305, %s25, 2
        %s307 = scalar_lea.vmem %s3, %s306
        %p308 = pneg %p122
        %p309 = pneg %p119
        %p310 = pneg %p148
        %p311 = pneg %p145
        %p312 = pneg %p178
        %p313 = pneg %p175
        %s314 = sand.u32 %s165, 1
        %s315 = scalar_lea.sflag [#allocation6], %s314
        %s316 = sand.u32 %s165, 1
        %s317 = smul.addr %s316, 128
        %s318 = scalar_lea.vmem [#allocation11], %s317
        %p319 = scmp.lt.s32.totalorder %s25, 2
        %s320 = scalar_select %p319, %s25, 2
        %s321 = scalar_lea.vmem %s3, %s320
        %s322 = smul.u32 16, %s26
        %p323 = scmp.eq.s32.totalorder %s25, 2
        %s324 = scalar_select %p323, %s26, 0
        %s325 = smul.u32 16, %s324
        %p327 = scmp.eq.s32.totalorder %s26, 0
        %p328 = scmp.eq.s32.totalorder %s25, 0
        %p329 = pnand %p327, %p328
        %p330 = pneg %p329
        // Predicated region
        $region57: #{tpu_custom_call.1} parent=39 // pred_check
          _
        $region58: #{tpu_custom_call.1} parent=39 // pred_check_branch
          %332 = sbr.rel (%p329) target = $region60
        $region59: #{tpu_custom_call.1} parent=39 // pred_region
          %v333 = vld [vmem:[#allocation4] sm:$0xf]
          %v334 = vld [vmem:[#allocation4 + $0x4] sm:$0xf]
          %v335 = vld [vmem:[#allocation4 + $0x8] sm:$0xf]
          %v336 = vld [vmem:[#allocation4 + $0xc] sm:$0xf]
          %v337 = vld [vmem:[#allocation4 + $0x10] sm:$0xf]
          %v338 = vld [vmem:[#allocation4 + $0x14] sm:$0xf]
          %v339 = vld [vmem:[#allocation4 + $0x18] sm:$0xf]
          %v340 = vld [vmem:[#allocation4 + $0x1c] sm:$0xf]
          %v341 = vld [vmem:[#allocation4 + $0x20] sm:$0xf]
          %v342 = vld [vmem:[#allocation4 + $0x24] sm:$0xf]
          %v343 = vld [vmem:[#allocation4 + $0x28] sm:$0xf]
          %v344 = vld [vmem:[#allocation4 + $0x2c] sm:$0xf]
          %v345 = vld [vmem:[#allocation4 + $0x30] sm:$0xf]
          %v346 = vld [vmem:[#allocation4 + $0x34] sm:$0xf]
          %v347 = vld [vmem:[#allocation4 + $0x38] sm:$0xf]
          %v348 = vld [vmem:[#allocation4 + $0x3c] sm:$0xf]
          %v349 = vld [vmem:[#allocation7] sm:$0xf]
          %v350 = vld [vmem:[#allocation7 + $0x4] sm:$0xf]
          %v351 = vld [vmem:[#allocation7 + $0x8] sm:$0xf]
          %v352 = vld [vmem:[#allocation7 + $0xc] sm:$0xf]
          %v353 = vld [vmem:[#allocation7 + $0x10] sm:$0xf]
          %v354 = vld [vmem:[#allocation7 + $0x14] sm:$0xf]
          %v355 = vld [vmem:[#allocation7 + $0x18] sm:$0xf]
          %v356 = vld [vmem:[#allocation7 + $0x1c] sm:$0xf]
          %v357 = vld [vmem:[#allocation7 + $0x20] sm:$0xf]
          %v358 = vld [vmem:[#allocation7 + $0x24] sm:$0xf]
          %v359 = vld [vmem:[#allocation7 + $0x28] sm:$0xf]
          %v360 = vld [vmem:[#allocation7 + $0x2c] sm:$0xf]
          %v361 = vld [vmem:[#allocation7 + $0x30] sm:$0xf]
          %v362 = vld [vmem:[#allocation7 + $0x34] sm:$0xf]
          %v363 = vld [vmem:[#allocation7 + $0x38] sm:$0xf]
          %v364 = vld [vmem:[#allocation7 + $0x3c] sm:$0xf]
          %v381 = vunpack.c.l.b16 %v333
          %v382 = vunpack.c.l.b16 %v334
          %v383 = vunpack.c.l.b16 %v335
          %v384 = vunpack.c.l.b16 %v336
          %v385 = vunpack.c.l.b16 %v337
          %v386 = vunpack.c.l.b16 %v338
          %v387 = vunpack.c.l.b16 %v339
          %v388 = vunpack.c.l.b16 %v340
          %v389 = vunpack.c.l.b16 %v341
          %v390 = vunpack.c.l.b16 %v342
          %v391 = vunpack.c.l.b16 %v343
          %v392 = vunpack.c.l.b16 %v344
          %v393 = vunpack.c.l.b16 %v345
          %v394 = vunpack.c.l.b16 %v346
          %v395 = vunpack.c.l.b16 %v347
          %v396 = vunpack.c.l.b16 %v348
          %v397 = vpack.c.b16 %v382, %v381
          %v398 = vpack.c.b16 %v384, %v383
          %v399 = vpack.c.b16 %v386, %v385
          %v400 = vpack.c.b16 %v388, %v387
          %v401 = vpack.c.b16 %v390, %v389
          %v402 = vpack.c.b16 %v392, %v391
          %v403 = vpack.c.b16 %v394, %v393
          %v404 = vpack.c.b16 %v396, %v395
          %v429 = vunpack.c.l.b16 %v349
          %v430 = vunpack.c.l.b16 %v350
          %v431 = vunpack.c.l.b16 %v351
          %v432 = vunpack.c.l.b16 %v352
          %v433 = vunpack.c.l.b16 %v353
          %v434 = vunpack.c.l.b16 %v354
          %v435 = vunpack.c.l.b16 %v355
          %v436 = vunpack.c.l.b16 %v356
          %v437 = vunpack.c.l.b16 %v357
          %v438 = vunpack.c.l.b16 %v358
          %v439 = vunpack.c.l.b16 %v359
          %v440 = vunpack.c.l.b16 %v360
          %v441 = vunpack.c.l.b16 %v361
          %v442 = vunpack.c.l.b16 %v362
          %v443 = vunpack.c.l.b16 %v363
          %v444 = vunpack.c.l.b16 %v364
          %v445 = vpack.c.b16 %v430, %v429
          %v446 = vpack.c.b16 %v432, %v431
          %v447 = vpack.c.b16 %v434, %v433
          %v448 = vpack.c.b16 %v436, %v435
          %v449 = vpack.c.b16 %v438, %v437
          %v450 = vpack.c.b16 %v440, %v439
          %v451 = vpack.c.b16 %v442, %v441
          %v452 = vpack.c.b16 %v444, %v443
          %461 = vmatprep.subr.bf16.mxu0 0
          %462 = vmatpush1.bf16.msra.mxu0 %v445
          %463 = vmatprep.subr.bf16.mxu0 0
          %464 = vmatpush1.bf16.msra.mxu0 %v446
          %465 = vmatprep.subr.bf16.mxu0 0
          %466 = vmatpush1.bf16.msra.mxu0 %v447
          %467 = vmatprep.subr.bf16.mxu0 0
          %468 = vmatpush1.bf16.msra.mxu0 %v448
          %469 = vmatprep.subr.bf16.mxu0 0
          %470 = vmatpush1.bf16.msra.mxu0 %v449
          %471 = vmatprep.subr.bf16.mxu0 0
          %472 = vmatpush1.bf16.msra.mxu0 %v450
          %473 = vmatprep.subr.bf16.mxu0 0
          %474 = vmatpush1.bf16.msra.mxu0 %v451
          %475 = vmatprep.subr.bf16.mxu0 0
          %476 = vmatpush1.bf16.msra.mxu0 %v452
          %477 = vmatprep.subr.bf16.mxu0 0
          %478 = vmatpush1.bf16.msra.mxu0 0
          %479 = vmatprep.subr.bf16.mxu0 0
          %480 = vmatpush1.bf16.msra.mxu0 0
          %481 = vmatprep.subr.bf16.mxu0 0
          %482 = vmatpush1.bf16.msra.mxu0 0
          %483 = vmatprep.subr.bf16.mxu0 0
          %484 = vmatpush1.bf16.msra.mxu0 0
          %485 = vmatprep.subr.bf16.mxu0 0
          %486 = vmatpush1.bf16.msra.mxu0 0
          %487 = vmatprep.subr.bf16.mxu0 0
          %488 = vmatpush1.bf16.msra.mxu0 0
          %489 = vmatprep.subr.bf16.mxu0 0
          %490 = vmatpush1.bf16.msra.mxu0 0
          %491 = vmatprep.subr.bf16.mxu0 0
          %492 = vmatpush1.bf16.msra.mxu0 0
          %493 = vmatprep.mubr.bf16.mxu0 0
          %494 = vmatmul.mubr.bf16.gmra.mrb[0].mxu0 %v397
          %v495 = vpop.f32.mrb[0].mxu0
          %v496 = vadd.f32 0.0, %v495
          %v497 = vpop.f32.mrb[0].mxu0
          %v498 = vpop.f32.mrb[0].mxu0
          %v499 = vadd.f32 0.0, %v498
          %v500 = vpop.f32.mrb[0].mxu0
          %501 = vmatprep.mubr.bf16.mxu0 0
          %502 = vmatmul.mubr.bf16.gmra.mrb[0].mxu0 %v398
          %v503 = vpop.f32.mrb[0].mxu0
          %v504 = vadd.f32 0.0, %v503
          %v505 = vpop.f32.mrb[0].mxu0
          %v506 = vpop.f32.mrb[0].mxu0
          %v507 = vadd.f32 0.0, %v506
          %v508 = vpop.f32.mrb[0].mxu0
          %509 = vmatprep.mubr.bf16.mxu0 0
          %510 = vmatmul.mubr.bf16.gmra.mrb[0].mxu0 %v399
          %v511 = vpop.f32.mrb[0].mxu0
          %v512 = vadd.f32 0.0, %v511
          %v513 = vpop.f32.mrb[0].mxu0
          %v514 = vpop.f32.mrb[0].mxu0
          %v515 = vadd.f32 0.0, %v514
          %v516 = vpop.f32.mrb[0].mxu0
          %517 = vmatprep.mubr.bf16.mxu0 0
          %518 = vmatmul.mubr.bf16.gmra.mrb[0].mxu0 %v400
          %v519 = vpop.f32.mrb[0].mxu0
          %v520 = vadd.f32 0.0, %v519
          %v521 = vpop.f32.mrb[0].mxu0
          %v522 = vpop.f32.mrb[0].mxu0
          %v523 = vadd.f32 0.0, %v522
          %v524 = vpop.f32.mrb[0].mxu0
          %525 = vmatprep.mubr.bf16.mxu0 0
          %526 = vmatmul.mubr.bf16.gmra.mrb[0].mxu0 %v401
          %v527 = vpop.f32.mrb[0].mxu0
          %v528 = vadd.f32 0.0, %v527
          %v529 = vpop.f32.mrb[0].mxu0
          %v530 = vpop.f32.mrb[0].mxu0
          %v531 = vadd.f32 0.0, %v530
          %v532 = vpop.f32.mrb[0].mxu0
          %533 = vmatprep.mubr.bf16.mxu0 0
          %534 = vmatmul.mubr.bf16.gmra.mrb[0].mxu0 %v402
          %v535 = vpop.f32.mrb[0].mxu0
          %v536 = vadd.f32 0.0, %v535
          %v537 = vpop.f32.mrb[0].mxu0
          %v538 = vpop.f32.mrb[0].mxu0
          %v539 = vadd.f32 0.0, %v538
          %v540 = vpop.f32.mrb[0].mxu0
          %541 = vmatprep.mubr.bf16.mxu0 0
          %542 = vmatmul.mubr.bf16.gmra.mrb[0].mxu0 %v403
          %v543 = vpop.f32.mrb[0].mxu0
          %v544 = vadd.f32 0.0, %v543
          %v545 = vpop.f32.mrb[0].mxu0
          %v546 = vpop.f32.mrb[0].mxu0
          %v547 = vadd.f32 0.0, %v546
          %v548 = vpop.f32.mrb[0].mxu0
          %549 = vmatprep.mubr.bf16.mxu0 0
          %550 = vmatmul.mubr.bf16.gmra.mrb[0].mxu0 %v404
          %v551 = vpop.f32.mrb[0].mxu0
          %v552 = vadd.f32 0.0, %v551
          %v553 = vpop.f32.mrb[0].mxu0
          %v554 = vpop.f32.mrb[0].mxu0
          %v555 = vadd.f32 0.0, %v554
          %v556 = vpop.f32.mrb[0].mxu0
          %557 = vdwg.mxu0
          %v558 = vpack.c.bf16 %v499, %v496
          %v559 = vpack.c.bf16 %v507, %v504
          %v560 = vpack.c.bf16 %v515, %v512
          %v561 = vpack.c.bf16 %v523, %v520
          %v562 = vpack.c.bf16 %v531, %v528
          %v563 = vpack.c.bf16 %v539, %v536
          %v564 = vpack.c.bf16 %v547, %v544
          %v565 = vpack.c.bf16 %v555, %v552
          %566 = vst [vmem:[#allocation3] sm:$0xff] %v558
          %567 = vst [vmem:[#allocation3 + $0x8] sm:$0xff] %v559
          %568 = vst [vmem:[#allocation3 + $0x10] sm:$0xff] %v560
          %569 = vst [vmem:[#allocation3 + $0x18] sm:$0xff] %v561
          %570 = vst [vmem:[#allocation3 + $0x20] sm:$0xff] %v562
          %571 = vst [vmem:[#allocation3 + $0x28] sm:$0xff] %v563
          %572 = vst [vmem:[#allocation3 + $0x30] sm:$0xff] %v564
          %573 = vst [vmem:[#allocation3 + $0x38] sm:$0xff] %v565
        $region60: #{tpu_custom_call.1} parent=39 // pred_fallthru
          _
        %p574 = scmp.gt.s32.totalorder %s25, 0
        %p575 = pnand %p327, %p574
        %p576 = pneg %p575
        // Predicated region
        $region61: #{tpu_custom_call.1} parent=39 // pred_check
          _
        $region62: #{tpu_custom_call.1} parent=39 // pred_check_branch
          %578 = sbr.rel (%p575) target = $region64
        $region63: #{tpu_custom_call.1} parent=39 // pred_region
          %v579 = vld [vmem:[#allocation2] sm:$0xff]
          %v580 = vld [vmem:[#allocation2 + $0x8] sm:$0xff]
          %v581 = vld [vmem:[#allocation2 + $0x10] sm:$0xff]
          %v582 = vld [vmem:[#allocation2 + $0x18] sm:$0xff]
          %v583 = vld [vmem:[#allocation2 + $0x20] sm:$0xff]
          %v584 = vld [vmem:[#allocation2 + $0x28] sm:$0xff]
          %v585 = vld [vmem:[#allocation2 + $0x30] sm:$0xff]
          %v586 = vld [vmem:[#allocation2 + $0x38] sm:$0xff]
          %v587 = vld [vmem:[%s285] sm:$0xf]
          %v588 = vld [vmem:[%s285 + $0x4] sm:$0xf]
          %v589 = vld [vmem:[%s285 + $0x8] sm:$0xf]
          %v590 = vld [vmem:[%s285 + $0xc] sm:$0xf]
          %v591 = vld [vmem:[%s285 + $0x10] sm:$0xf]
          %v592 = vld [vmem:[%s285 + $0x14] sm:$0xf]
          %v593 = vld [vmem:[%s285 + $0x18] sm:$0xf]
          %v594 = vld [vmem:[%s285 + $0x1c] sm:$0xf]
          %v595 = vld [vmem:[%s285 + $0x20] sm:$0xf]
          %v596 = vld [vmem:[%s285 + $0x24] sm:$0xf]
          %v597 = vld [vmem:[%s285 + $0x28] sm:$0xf]
          %v598 = vld [vmem:[%s285 + $0x2c] sm:$0xf]
          %v599 = vld [vmem:[%s285 + $0x30] sm:$0xf]
          %v600 = vld [vmem:[%s285 + $0x34] sm:$0xf]
          %v601 = vld [vmem:[%s285 + $0x38] sm:$0xf]
          %v602 = vld [vmem:[%s285 + $0x3c] sm:$0xf]
          %v619 = vunpack.c.l.b16 %v587
          %v620 = vunpack.c.l.b16 %v588
          %v621 = vunpack.c.l.b16 %v589
          %v622 = vunpack.c.l.b16 %v590
          %v623 = vunpack.c.l.b16 %v591
          %v624 = vunpack.c.l.b16 %v592
          %v625 = vunpack.c.l.b16 %v593
          %v626 = vunpack.c.l.b16 %v594
          %v627 = vunpack.c.l.b16 %v595
          %v628 = vunpack.c.l.b16 %v596
          %v629 = vunpack.c.l.b16 %v597
          %v630 = vunpack.c.l.b16 %v598
          %v631 = vunpack.c.l.b16 %v599
          %v632 = vunpack.c.l.b16 %v600
          %v633 = vunpack.c.l.b16 %v601
          %v634 = vunpack.c.l.b16 %v602
          %v635 = vpack.c.b16 %v620, %v619
          %v636 = vpack.c.b16 %v622, %v621
          %v637 = vpack.c.b16 %v624, %v623
          %v638 = vpack.c.b16 %v626, %v625
          %v639 = vpack.c.b16 %v628, %v627
          %v640 = vpack.c.b16 %v630, %v629
          %v641 = vpack.c.b16 %v632, %v631
          %v642 = vpack.c.b16 %v634, %v633
          %651 = vmatprep.subr.bf16.mxu0 0
          %652 = vmatpush1.bf16.msra.mxu0 %v635
          %653 = vmatprep.subr.bf16.mxu0 0
          %654 = vmatpush1.bf16.msra.mxu0 %v636
          %655 = vmatprep.subr.bf16.mxu0 0
          %656 = vmatpush1.bf16.msra.mxu0 %v637
          %657 = vmatprep.subr.bf16.mxu0 0
          %658 = vmatpush1.bf16.msra.mxu0 %v638
          %659 = vmatprep.subr.bf16.mxu0 0
          %660 = vmatpush1.bf16.msra.mxu0 %v639
          %661 = vmatprep.subr.bf16.mxu0 0
          %662 = vmatpush1.bf16.msra.mxu0 %v640
          %663 = vmatprep.subr.bf16.mxu0 0
          %664 = vmatpush1.bf16.msra.mxu0 %v641
          %665 = vmatprep.subr.bf16.mxu0 0
          %666 = vmatpush1.bf16.msra.mxu0 %v642
          %667 = vmatprep.subr.bf16.mxu0 0
          %668 = vmatpush1.bf16.msra.mxu0 0
          %669 = vmatprep.subr.bf16.mxu0 0
          %670 = vmatpush1.bf16.msra.mxu0 0
          %671 = vmatprep.subr.bf16.mxu0 0
          %672 = vmatpush1.bf16.msra.mxu0 0
          %673 = vmatprep.subr.bf16.mxu0 0
          %674 = vmatpush1.bf16.msra.mxu0 0
          %675 = vmatprep.subr.bf16.mxu0 0
          %676 = vmatpush1.bf16.msra.mxu0 0
          %677 = vmatprep.subr.bf16.mxu0 0
          %678 = vmatpush1.bf16.msra.mxu0 0
          %679 = vmatprep.subr.bf16.mxu0 0
          %680 = vmatpush1.bf16.msra.mxu0 0
          %681 = vmatprep.subr.bf16.mxu0 0
          %682 = vmatpush1.bf16.msra.mxu0 0
          %683 = vmatprep.mubr.bf16.mxu0 0
          %684 = vmatmul.mubr.bf16.gmra.mrb[0].mxu0 %v579
          %v685 = vpop.f32.mrb[0].mxu0
          %v686 = vadd.f32 0.0, %v685
          %v687 = vpop.f32.mrb[0].mxu0
          %v688 = vpop.f32.mrb[0].mxu0
          %v689 = vadd.f32 0.0, %v688
          %v690 = vpop.f32.mrb[0].mxu0
          %691 = vmatprep.mubr.bf16.mxu0 0
          %692 = vmatmul.mubr.bf16.gmra.mrb[0].mxu0 %v580
          %v693 = vpop.f32.mrb[0].mxu0
          %v694 = vadd.f32 0.0, %v693
          %v695 = vpop.f32.mrb[0].mxu0
          %v696 = vpop.f32.mrb[0].mxu0
          %v697 = vadd.f32 0.0, %v696
          %v698 = vpop.f32.mrb[0].mxu0
          %699 = vmatprep.mubr.bf16.mxu0 0
          %700 = vmatmul.mubr.bf16.gmra.mrb[0].mxu0 %v581
          %v701 = vpop.f32.mrb[0].mxu0
          %v702 = vadd.f32 0.0, %v701
          %v703 = vpop.f32.mrb[0].mxu0
          %v704 = vpop.f32.mrb[0].mxu0
          %v705 = vadd.f32 0.0, %v704
          %v706 = vpop.f32.mrb[0].mxu0
          %707 = vmatprep.mubr.bf16.mxu0 0
          %708 = vmatmul.mubr.bf16.gmra.mrb[0].mxu0 %v582
          %v709 = vpop.f32.mrb[0].mxu0
          %v710 = vadd.f32 0.0, %v709
          %v711 = vpop.f32.mrb[0].mxu0
          %v712 = vpop.f32.mrb[0].mxu0
          %v713 = vadd.f32 0.0, %v712
          %v714 = vpop.f32.mrb[0].mxu0
          %715 = vmatprep.mubr.bf16.mxu0 0
          %716 = vmatmul.mubr.bf16.gmra.mrb[0].mxu0 %v583
          %v717 = vpop.f32.mrb[0].mxu0
          %v718 = vadd.f32 0.0, %v717
          %v719 = vpop.f32.mrb[0].mxu0
          %v720 = vpop.f32.mrb[0].mxu0
          %v721 = vadd.f32 0.0, %v720
          %v722 = vpop.f32.mrb[0].mxu0
          %723 = vmatprep.mubr.bf16.mxu0 0
          %724 = vmatmul.mubr.bf16.gmra.mrb[0].mxu0 %v584
          %v725 = vpop.f32.mrb[0].mxu0
          %v726 = vadd.f32 0.0, %v725
          %v727 = vpop.f32.mrb[0].mxu0
          %v728 = vpop.f32.mrb[0].mxu0
          %v729 = vadd.f32 0.0, %v728
          %v730 = vpop.f32.mrb[0].mxu0
          %731 = vmatprep.mubr.bf16.mxu0 0
          %732 = vmatmul.mubr.bf16.gmra.mrb[0].mxu0 %v585
          %v733 = vpop.f32.mrb[0].mxu0
          %v734 = vadd.f32 0.0, %v733
          %v735 = vpop.f32.mrb[0].mxu0
          %v736 = vpop.f32.mrb[0].mxu0
          %v737 = vadd.f32 0.0, %v736
          %v738 = vpop.f32.mrb[0].mxu0
          %739 = vmatprep.mubr.bf16.mxu0 0
          %740 = vmatmul.mubr.bf16.gmra.mrb[0].mxu0 %v586
          %v741 = vpop.f32.mrb[0].mxu0
          %v742 = vadd.f32 0.0, %v741
          %v743 = vpop.f32.mrb[0].mxu0
          %v744 = vpop.f32.mrb[0].mxu0
          %v745 = vadd.f32 0.0, %v744
          %v746 = vpop.f32.mrb[0].mxu0
          %747 = vdwg.mxu0
          %v748 = vpack.c.bf16 %v689, %v686
          %v749 = vpack.c.bf16 %v697, %v694
          %v750 = vpack.c.bf16 %v705, %v702
          %v751 = vpack.c.bf16 %v713, %v710
          %v752 = vpack.c.bf16 %v721, %v718
          %v753 = vpack.c.bf16 %v729, %v726
          %v754 = vpack.c.bf16 %v737, %v734
          %v755 = vpack.c.bf16 %v745, %v742
          %756 = vst [vmem:[#allocation3] sm:$0xff] %v748
          %757 = vst [vmem:[#allocation3 + $0x8] sm:$0xff] %v749
          %758 = vst [vmem:[#allocation3 + $0x10] sm:$0xff] %v750
          %759 = vst [vmem:[#allocation3 + $0x18] sm:$0xff] %v751
          %760 = vst [vmem:[#allocation3 + $0x20] sm:$0xff] %v752
          %761 = vst [vmem:[#allocation3 + $0x28] sm:$0xff] %v753
          %762 = vst [vmem:[#allocation3 + $0x30] sm:$0xff] %v754
          %763 = vst [vmem:[#allocation3 + $0x38] sm:$0xff] %v755
        $region64: #{tpu_custom_call.1} parent=39 // pred_fallthru
          _
        %v764 = vld [vmem:[#allocation10] sm:$0xf]
        %v765 = vld [vmem:[#allocation10 + $0x4] sm:$0xf]
        %v766 = vld [vmem:[#allocation10 + $0x8] sm:$0xf]
        %v767 = vld [vmem:[#allocation10 + $0xc] sm:$0xf]
        %v768 = vld [vmem:[#allocation10 + $0x10] sm:$0xf]
        %v769 = vld [vmem:[#allocation10 + $0x14] sm:$0xf]
        %v770 = vld [vmem:[#allocation10 + $0x18] sm:$0xf]
        %v771 = vld [vmem:[#allocation10 + $0x1c] sm:$0xf]
        %v772 = vld [vmem:[#allocation10 + $0x20] sm:$0xf]
        %v773 = vld [vmem:[#allocation10 + $0x24] sm:$0xf]
        %v774 = vld [vmem:[#allocation10 + $0x28] sm:$0xf]
        %v775 = vld [vmem:[#allocation10 + $0x2c] sm:$0xf]
        %v776 = vld [vmem:[#allocation10 + $0x30] sm:$0xf]
        %v777 = vld [vmem:[#allocation10 + $0x34] sm:$0xf]
        %v778 = vld [vmem:[#allocation10 + $0x38] sm:$0xf]
        %v779 = vld [vmem:[#allocation10 + $0x3c] sm:$0xf]
        %v780 = vld [vmem:[#allocation3] sm:$0xff]
        %v781 = vld [vmem:[#allocation3 + $0x8] sm:$0xff]
        %v782 = vld [vmem:[#allocation3 + $0x10] sm:$0xff]
        %v783 = vld [vmem:[#allocation3 + $0x18] sm:$0xff]
        %v784 = vld [vmem:[#allocation3 + $0x20] sm:$0xff]
        %v785 = vld [vmem:[#allocation3 + $0x28] sm:$0xff]
        %v786 = vld [vmem:[#allocation3 + $0x30] sm:$0xff]
        %v787 = vld [vmem:[#allocation3 + $0x38] sm:$0xff]
        %v788 = vld [vmem:[%s321] sm:$0x1]
        %v790 = vlaneseq
        %v791 = vshrl.u32 %v790, 7
        %v792 = vsub.s32 0, %v791
        %v793 = vrot.slane %v788, %v792
        %v811 = vunpack.c.l.b16 %v764
        %v812 = vunpack.c.l.b16 %v765
        %v813 = vunpack.c.l.b16 %v766
        %v814 = vunpack.c.l.b16 %v767
        %v815 = vunpack.c.l.b16 %v768
        %v816 = vunpack.c.l.b16 %v769
        %v817 = vunpack.c.l.b16 %v770
        %v818 = vunpack.c.l.b16 %v771
        %v819 = vunpack.c.l.b16 %v772
        %v820 = vunpack.c.l.b16 %v773
        %v821 = vunpack.c.l.b16 %v774
        %v822 = vunpack.c.l.b16 %v775
        %v823 = vunpack.c.l.b16 %v776
        %v824 = vunpack.c.l.b16 %v777
        %v825 = vunpack.c.l.b16 %v778
        %v826 = vunpack.c.l.b16 %v779
        %v827 = vpack.c.b16 %v812, %v811
        %v828 = vpack.c.b16 %v814, %v813
        %v829 = vpack.c.b16 %v816, %v815
        %v830 = vpack.c.b16 %v818, %v817
        %v831 = vpack.c.b16 %v820, %v819
        %v832 = vpack.c.b16 %v822, %v821
        %v833 = vpack.c.b16 %v824, %v823
        %v834 = vpack.c.b16 %v826, %v825
        %843 = vmatprep.subr.bf16.mxu0 0
        %844 = vmatpush1.bf16.msra.mxu0 %v780
        %845 = vmatprep.subr.bf16.mxu0 0
        %846 = vmatpush1.bf16.msra.mxu0 %v781
        %847 = vmatprep.subr.bf16.mxu0 0
        %848 = vmatpush1.bf16.msra.mxu0 %v782
        %849 = vmatprep.subr.bf16.mxu0 0
        %850 = vmatpush1.bf16.msra.mxu0 %v783
        %851 = vmatprep.subr.bf16.mxu0 0
        %852 = vmatpush1.bf16.msra.mxu0 %v784
        %853 = vmatprep.subr.bf16.mxu0 0
        %854 = vmatpush1.bf16.msra.mxu0 %v785
        %855 = vmatprep.subr.bf16.mxu0 0
        %856 = vmatpush1.bf16.msra.mxu0 %v786
        %857 = vmatprep.subr.bf16.mxu0 0
        %858 = vmatpush1.bf16.msra.mxu0 %v787
        %859 = vmatprep.subr.bf16.mxu0 0
        %860 = vmatpush1.bf16.msra.mxu0 0
        %861 = vmatprep.subr.bf16.mxu0 0
        %862 = vmatpush1.bf16.msra.mxu0 0
        %863 = vmatprep.subr.bf16.mxu0 0
        %864 = vmatpush1.bf16.msra.mxu0 0
        %865 = vmatprep.subr.bf16.mxu0 0
        %866 = vmatpush1.bf16.msra.mxu0 0
        %867 = vmatprep.subr.bf16.mxu0 0
        %868 = vmatpush1.bf16.msra.mxu0 0
        %869 = vmatprep.subr.bf16.mxu0 0
        %870 = vmatpush1.bf16.msra.mxu0 0
        %871 = vmatprep.subr.bf16.mxu0 0
        %872 = vmatpush1.bf16.msra.mxu0 0
        %873 = vmatprep.subr.bf16.mxu0 0
        %874 = vmatpush1.bf16.msra.mxu0 0
        %875 = vmatprep.mubr.bf16.mxu0 0
        %876 = vmatmul.mubr.bf16.gmra.mrb[0].mxu0 %v827
        %v877 = vpop.f32.mrb[0].mxu0
        %v878 = vadd.f32 %v793, %v877
        %v879 = vpop.f32.mrb[0].mxu0
        %v880 = vpop.f32.mrb[0].mxu0
        %v881 = vadd.f32 %v793, %v880
        %v882 = vpop.f32.mrb[0].mxu0
        %883 = vmatprep.mubr.bf16.mxu0 0
        %884 = vmatmul.mubr.bf16.gmra.mrb[0].mxu0 %v828
        %v885 = vpop.f32.mrb[0].mxu0
        %v886 = vadd.f32 %v793, %v885
        %v887 = vpop.f32.mrb[0].mxu0
        %v888 = vpop.f32.mrb[0].mxu0
        %v889 = vadd.f32 %v793, %v888
        %v890 = vpop.f32.mrb[0].mxu0
        %891 = vmatprep.mubr.bf16.mxu0 0
        %892 = vmatmul.mubr.bf16.gmra.mrb[0].mxu0 %v829
        %v893 = vpop.f32.mrb[0].mxu0
        %v894 = vadd.f32 %v793, %v893
        %v895 = vpop.f32.mrb[0].mxu0
        %v896 = vpop.f32.mrb[0].mxu0
        %v897 = vadd.f32 %v793, %v896
        %v898 = vpop.f32.mrb[0].mxu0
        %899 = vmatprep.mubr.bf16.mxu0 0
        %900 = vmatmul.mubr.bf16.gmra.mrb[0].mxu0 %v830
        %v901 = vpop.f32.mrb[0].mxu0
        %v902 = vadd.f32 %v793, %v901
        %v903 = vpop.f32.mrb[0].mxu0
        %v904 = vpop.f32.mrb[0].mxu0
        %v905 = vadd.f32 %v793, %v904
        %v906 = vpop.f32.mrb[0].mxu0
        %907 = vmatprep.mubr.bf16.mxu0 0
        %908 = vmatmul.mubr.bf16.gmra.mrb[0].mxu0 %v831
        %v909 = vpop.f32.mrb[0].mxu0
        %v910 = vadd.f32 %v793, %v909
        %v911 = vpop.f32.mrb[0].mxu0
        %v912 = vpop.f32.mrb[0].mxu0
        %v913 = vadd.f32 %v793, %v912
        %v914 = vpop.f32.mrb[0].mxu0
        %915 = vmatprep.mubr.bf16.mxu0 0
        %916 = vmatmul.mubr.bf16.gmra.mrb[0].mxu0 %v832
        %v917 = vpop.f32.mrb[0].mxu0
        %v918 = vadd.f32 %v793, %v917
        %v919 = vpop.f32.mrb[0].mxu0
        %v920 = vpop.f32.mrb[0].mxu0
        %v921 = vadd.f32 %v793, %v920
        %v922 = vpop.f32.mrb[0].mxu0
        %923 = vmatprep.mubr.bf16.mxu0 0
        %924 = vmatmul.mubr.bf16.gmra.mrb[0].mxu0 %v833
        %v925 = vpop.f32.mrb[0].mxu0
        %v926 = vadd.f32 %v793, %v925
        %v927 = vpop.f32.mrb[0].mxu0
        %v928 = vpop.f32.mrb[0].mxu0
        %v929 = vadd.f32 %v793, %v928
        %v930 = vpop.f32.mrb[0].mxu0
        %931 = vmatprep.mubr.bf16.mxu0 0
        %932 = vmatmul.mubr.bf16.gmra.mrb[0].mxu0 %v834
        %v933 = vpop.f32.mrb[0].mxu0
        %v934 = vadd.f32 %v793, %v933
        %v935 = vpop.f32.mrb[0].mxu0
        %v936 = vpop.f32.mrb[0].mxu0
        %v937 = vadd.f32 %v793, %v936
        %v938 = vpop.f32.mrb[0].mxu0
        %939 = vdwg.mxu0
        %s940 = smul.u32 %s26, 128
        %p941 = scmp.lt.s32.totalorder %s25, 2
        // Predicated region
        $region65: #{tpu_custom_call.1} parent=39 // pred_check
          %p942 = pneg %p941
        $region66: #{tpu_custom_call.1} parent=39 // pred_check_branch
          %944 = sbr.rel (%p942) target = $region68
        $region67: #{tpu_custom_call.1} parent=39 // pred_region
          %v945 = vmax.f32 %v878, 0.0
          %v946 = vmax.f32 %v881, 0.0
          %v947 = vmax.f32 %v886, 0.0
          %v948 = vmax.f32 %v889, 0.0
          %v949 = vmax.f32 %v894, 0.0
          %v950 = vmax.f32 %v897, 0.0
          %v951 = vmax.f32 %v902, 0.0
          %v952 = vmax.f32 %v905, 0.0
          %v953 = vmax.f32 %v910, 0.0
          %v954 = vmax.f32 %v913, 0.0
          %v955 = vmax.f32 %v918, 0.0
          %v956 = vmax.f32 %v921, 0.0
          %v957 = vmax.f32 %v926, 0.0
          %v958 = vmax.f32 %v929, 0.0
          %v959 = vmax.f32 %v934, 0.0
          %v960 = vmax.f32 %v937, 0.0
          %v961 = vpack.c.bf16 %v946, %v945
          %v962 = vpack.c.bf16 %v948, %v947
          %v963 = vpack.c.bf16 %v950, %v949
          %v964 = vpack.c.bf16 %v952, %v951
          %v965 = vpack.c.bf16 %v954, %v953
          %v966 = vpack.c.bf16 %v956, %v955
          %v967 = vpack.c.bf16 %v958, %v957
          %v968 = vpack.c.bf16 %v960, %v959
          %s969 = sshra.s32 %s940, 4
          %s970 = sand.u32 %s940, 15
          %s971 = smul.addr %s969, 8
          %s972 = scalar_lea.vmem [#allocation2], %s971
          %973 = vst [vmem:[%s972] sm:$0xff] %v961
          %974 = vst [vmem:[%s972 + $0x8] sm:$0xff] %v962
          %975 = vst [vmem:[%s972 + $0x10] sm:$0xff] %v963
          %976 = vst [vmem:[%s972 + $0x18] sm:$0xff] %v964
          %977 = vst [vmem:[%s972 + $0x20] sm:$0xff] %v965
          %978 = vst [vmem:[%s972 + $0x28] sm:$0xff] %v966
          %979 = vst [vmem:[%s972 + $0x30] sm:$0xff] %v967
          %980 = vst [vmem:[%s972 + $0x38] sm:$0xff] %v968
        $region68: #{tpu_custom_call.1} parent=39 // pred_fallthru
          _
        %p981 = scmp.eq.s32.totalorder %s25, 2
        // Predicated region
        $region69: #{tpu_custom_call.1} parent=39 // pred_check
          %p982 = pneg %p981
        $region70: #{tpu_custom_call.1} parent=39 // pred_check_branch
          %984 = sbr.rel (%p982) target = $region72
        $region71: #{tpu_custom_call.1} parent=39 // pred_region
          %985 = vst [vmem:[%s318] sm:$0xff] %v878
          %986 = vst [vmem:[%s318 + $0x8] sm:$0xff] %v881
          %987 = vst [vmem:[%s318 + $0x10] sm:$0xff] %v886
          %988 = vst [vmem:[%s318 + $0x18] sm:$0xff] %v889
          %989 = vst [vmem:[%s318 + $0x20] sm:$0xff] %v894
          %990 = vst [vmem:[%s318 + $0x28] sm:$0xff] %v897
          %991 = vst [vmem:[%s318 + $0x30] sm:$0xff] %v902
          %992 = vst [vmem:[%s318 + $0x38] sm:$0xff] %v905
          %993 = vst [vmem:[%s318 + $0x40] sm:$0xff] %v910
          %994 = vst [vmem:[%s318 + $0x48] sm:$0xff] %v913
          %995 = vst [vmem:[%s318 + $0x50] sm:$0xff] %v918
          %996 = vst [vmem:[%s318 + $0x58] sm:$0xff] %v921
          %997 = vst [vmem:[%s318 + $0x60] sm:$0xff] %v926
          %998 = vst [vmem:[%s318 + $0x68] sm:$0xff] %v929
          %999 = vst [vmem:[%s318 + $0x70] sm:$0xff] %v934
          %1000 = vst [vmem:[%s318 + $0x78] sm:$0xff] %v937
        $region72: #{tpu_custom_call.1} parent=39 // pred_fallthru
          _
        %s1001 = sand.u32 %s165, 1
        %s1002 = scalar_lea.sflag [#allocation6], %s1001
        %s1003 = sand.u32 %s165, 1
        %s1004 = smul.addr %s1003, 128
        %s1005 = scalar_lea.vmem [#allocation11], %s1004
        // Predicated region
        $region73: #{tpu_custom_call.1} parent=39 // pred_check
          %p1006 = pneg %p175
        $region74: #{tpu_custom_call.1} parent=39 // pred_check_branch
          %1008 = sbr.rel (%p1006) target = $region76
        $region75: #{tpu_custom_call.1} parent=39 // pred_region
          %p1009 = scmp.eq.s32.totalorder %s25, 2
          %s1010 = scalar_select %p1009, %s26, 0
          %s1011 = smul.u32 16, %s1010
          %s1013 = ssub.s32 2048, 2048
          %1014 = vsyncadd %s1002, %s1013
          %s1015 = smul.addr %s1011, 128
          %s1016 = scalar_lea.hbm %s5, %s1015
          %s1017 = sshll.u32 %s1005, 4
          %s1018 = int_to_ptr.vmem [resolvable:$true] %s1017
          %1023 = dma.vmem_to_hbm [thread:$0]  %s1018, 2048, %s1016, %s1002, 128, 128, 8
        $region76: #{tpu_custom_call.1} parent=39 // pred_fallthru
          _
      $region40: #{tpu_custom_call.1} parent=5 // pred_fallthru
        _
      %p1024 = scmp.le.s32.totalorder 2, %s16
      // Predicated region
      $region77: #{tpu_custom_call.1} parent=5 // pred_check
        %p1025 = pneg %p1024
      $region78: #{tpu_custom_call.1} parent=5 // pred_check_branch
        %1027 = sbr.rel (%p1025) target = $region80
      $region79: #{tpu_custom_call.1} parent=5 // pred_region
        %s1028 = ssub.s32 %s16, 2
        // Predicated region
        $region81: #{tpu_custom_call.1} parent=79 // pred_check
          %p1029 = pneg %p181
        $region82: #{tpu_custom_call.1} parent=79 // pred_check_branch
          %1031 = sbr.rel (%p1029) target = $region84
        $region83: #{tpu_custom_call.1} parent=79 // pred_region
          %s1032 = sand.u32 %s166, 1
          %s1033 = scalar_lea.sflag [#allocation6], %s1032
          %s1034 = sand.u32 %s166, 1
          %s1035 = smul.addr %s1034, 128
          %s1036 = scalar_lea.vmem [#allocation11], %s1035
          %1037 = dma.done %s1033, 2048
        $region84: #{tpu_custom_call.1} parent=79 // pred_fallthru
          _
      $region80: #{tpu_custom_call.1} parent=5 // pred_fallthru
        _
    $region6: #{tpu_custom_call.1} parent=1 // loop_footer
      %s20 = sadd.s32 1, %s16
    $region7: #{tpu_custom_call.1} parent=1 // loop_footer_branch
      %15 = sbr.rel target = $region3
    $region8: #{tpu_custom_call.1} parent=1 // loop_exit
      _
    %1038 = vsyncpa [#allocation5], 1
    %s1039 = scalar_lea.sflag [#allocation5], 1
    %1040 = vsyncpa %s1039, 1
    %1041 = vsyncpa [#allocation8], 1
    %1042 = vsyncpa [#allocation6], 1
    %s1043 = scalar_lea.sflag [#allocation6], 1
    %1044 = vsyncpa %s1043, 1

</llo_original>
